<compile_context>
chip_gen: v7x
topology: tpu7x:2x2x1
jax: 0.10.0
libtpu: 0.0.40
codegen_flags: <defaults>
</compile_context>

<pallas_src>
import jax
import jax.numpy as jnp
from jax import lax
from jax.experimental import pallas as pl
from jax.experimental.pallas import tpu as pltpu

BN_EPS = 1e-5
LEAKY_SLOPE = 0.01  # nn.LeakyReLU default


def _round_up(x, m):
    return ((x + m - 1) // m) * m


# ----------------------------------------------------------------------------
# Pallas kernel: stacked (1x1 conv -> BN -> LeakyReLU) + max over samples
# ----------------------------------------------------------------------------
def _make_mlp_max_kernel(num_layers, ns):
    def kernel(x_ref, *refs):
        out_ref = refs[-1]
        params = refs[:-1]
        # f32 HBM read (half the traffic of a pre-cast pass); bf16 cast is free.
        h = x_ref[...].astype(jnp.bfloat16)                    # (T*Ns, Cin)
        for l in range(num_layers):
            w = params[2 * l][...]                             # (C_l, C_{l+1}) bf16
            shift = params[2 * l + 1][...]                     # (1, C_{l+1})
            h = jnp.dot(h, w, preferred_element_type=jnp.float32)   # MXU, f32 acc
            if l < num_layers - 1:
                # bf16 elementwise path: halves VALU work / vreg pressure on
                # bf16-native VPUs (v6e/v7x); upcast is implicit on v5e.
                h = h.astype(jnp.bfloat16)
                h = h + shift                                  # bf16 shift
                h = jnp.maximum(h, LEAKY_SLOPE * h)            # LeakyReLU, 2 VALU ops
            else:
                h = h + shift                                  # f32 shift
                h = jnp.maximum(h, LEAKY_SLOPE * h)
        t = out_ref.shape[0]
        c = h.shape[-1]
        # (T*Ns, C) -> (T, Ns, C): Ns % 8 == 0 so this never crosses (8,128)
        # tile boundaries; max is a clean sublane reduction.
        out_ref[...] = jnp.max(h.reshape(t, ns, c), axis=1)

    return kernel


def _vmem_capacity_bytes():
    try:
        cap = int(pltpu.get_tpu_info().vmem_capacity_bytes)
    except Exception:
        cap = 64 * 1024 * 1024            # v7x-safe fallback
    return max(cap, 32 * 1024 * 1024)


def _choose_group_tile(G, Ns, Cin, weight_shapes, cout_pad, vmem_cap):
    """Pick the group-tile T (rows of the output block)."""
    cin_pad = _round_up(Cin, 128)
    c_pads = [_round_up(co, 128) for (_, co) in weight_shapes]
    cmax = max(c_pads + [128])

    # Conservative live bytes per group (per output row) of one pipelined block.
    per_group = Ns * (2 * cin_pad * 4      # f32 input block, double buffered, lane padded
                      + cmax * 4           # f32 MXU result
                      + 2 * cmax * 2)      # live bf16 intermediates
    per_group += 2 * cout_pad * 4          # f32 output block, double buffered

    # Weight / shift blocks (double buffered by the pipeline even though their
    # block index is constant).
    param_bytes = 0
    for (ci, co) in weight_shapes:
        co_pad = _round_up(co, 128)
        param_bytes += 2 * _round_up(ci, 16) * co_pad * 2   # bf16 weight
        param_bytes += 2 * 8 * co_pad * 4                   # shift row (padded sublanes)

    budget = max(int(vmem_cap * 0.30) - param_bytes, per_group * 8)
    t_vmem = max(8, (budget // per_group) // 8 * 8)

    # ~2K sublane rows per block is already ~roofline; bigger tiles only add
    # exposed prologue/epilogue DMA.
    t_rows = max(8, (2048 // Ns) // 8 * 8)

    T = min(t_vmem, t_rows)
    if G >= 64:
        # keep >= 8 grid steps so double buffering hides the DMA
        # (>= 4 steps per TensorCore on v7x's 2-TC chips).
        T = min(T, max(8, ((G // 8) // 8) * 8))
    if G >= 8:
        T = min(T, (G // 8) * 8)           # blocks stay a multiple of 8 rows
    else:
        T = G                              # tiny grids: block == full array dim
    return max(T, 1)


def mlp_max_pallas(new_points, folded_params):
    """new_points: [B, Np, Ns, C_in] (f32) -> [B, Np, C_out] (f32)."""
    B, Np, Ns0, Cin = new_points.shape

    # Guarantee Ns % 8 == 0 by duplicating the first sample of each group
    # (duplicates cannot change the max). The ball-query path already pads the
    # indices upstream, so this is a no-op there.
    Ns = _round_up(max(Ns0, 8), 8)
    if Ns != Ns0:
        pad = jnp.broadcast_to(new_points[:, :, :1, :], (B, Np, Ns - Ns0, Cin))
        new_points = jnp.concatenate([new_points, pad], axis=2)

    G = B * Np
    num_layers = len(folded_params)
    Cout = folded_params[-1][0].shape[1]
    Cout_pad = _round_up(Cout, 128)        # lane-dense output block (unmasked stores)

    # --- fold params: bf16 weights, bf16/f32 shifts; pad last-layer channels ---
    weights, shifts = [], []
    for l, (w, s) in enumerate(folded_params):
        w = w.astype(jnp.float32)
        s = s.reshape(1, -1).astype(jnp.float32)
        last = (l == num_layers - 1)
        if last and Cout_pad != Cout:
            w = jnp.pad(w, ((0, 0), (0, Cout_pad - Cout)))
            s = jnp.pad(s, ((0, 0), (0, Cout_pad - Cout)))
        weights.append(w.astype(jnp.bfloat16))
        shifts.append(s if last else s.astype(jnp.bfloat16))

    weight_shapes = [(w.shape[0], w.shape[1]) for w in folded_params and
                     [p[0] for p in folded_params]]
    vmem_cap = _vmem_capacity_bytes()
    T = _choose_group_tile(G, Ns, Cin, weight_shapes, Cout_pad, vmem_cap)
    grid = (pl.cdiv(G, T),)

    # Feed the f32 grouped slab directly (free, contiguous reshape): no extra
    # HBM pad/cast pass. Partial last block is handled by Pallas.
    x2d = new_points.reshape(G * Ns, Cin)

    in_specs = [pl.BlockSpec((T * Ns, Cin), lambda i: (i, 0))]
    flat_params = []
    for w, s in zip(weights, shifts):
        flat_params += [w, s]
        in_specs.append(pl.BlockSpec(w.shape, lambda i: (0, 0)))
        in_specs.append(pl.BlockSpec(s.shape, lambda i: (0, 0)))

    flops = 2 * G * Ns * sum(ci * co for (ci, co) in weight_shapes)
    bytes_accessed = (G * Ns * Cin * 4 + G * Cout_pad * 4
                      + sum(ci * co * 2 + co * 4 for (ci, co) in weight_shapes))

    out = pl.pallas_call(
        _make_mlp_max_kernel(num_layers, Ns),
        out_shape=jax.ShapeDtypeStruct((G, Cout_pad), jnp.float32),
        grid=grid,
        in_specs=in_specs,
        out_specs=pl.BlockSpec((T, Cout_pad), lambda i: (i, 0)),
        compiler_params=pltpu.CompilerParams(
            dimension_semantics=("parallel",),
            vmem_limit_bytes=min(int(vmem_cap * 0.85), 100 * 1024 * 1024)),
        cost_estimate=pl.CostEstimate(flops=flops, transcendentals=0,
                                      bytes_accessed=bytes_accessed),
    )(x2d, *flat_params)

    return out[:, :Cout].reshape(B, Np, Cout)


# ----------------------------------------------------------------------------
# Plain-JAX glue: sampling and grouping (data-dependent gathers / sorts)
# ----------------------------------------------------------------------------
def index_points(points, idx):
    # points: [B, N, C], idx: [B, D1, ..., Dn] -> [B, D1, ..., Dn, C]
    B = points.shape[0]
    batch = jnp.arange(B).reshape((B,) + (1,) * (idx.ndim - 1))
    return points[batch, idx]


def square_distance(src, dst):
    dist = -2.0 * jnp.matmul(src, jnp.transpose(dst, (0, 2, 1)))
    dist = dist + jnp.sum(src ** 2, -1)[..., None]
    dist = dist + jnp.sum(dst ** 2, -1)[:, None, :]
    return dist


def farthest_point_sample(xyz, npoint, key):
    B, N, _ = xyz.shape
    distance0 = jnp.full((B, N), 1e10, dtype=jnp.float32)
    farthest0 = jax.random.randint(key, (B,), 0, N, dtype=jnp.int32)
    centroids0 = jnp.zeros((B, npoint), dtype=jnp.int32)
    batch_idx = jnp.arange(B)

    def body(i, carry):
        centroids, distance, farthest = carry
        centroids = centroids.at[:, i].set(farthest)
        centroid = xyz[batch_idx, farthest, :][:, None, :]      # [B, 1, 3]
        dist = jnp.sum((xyz - centroid) ** 2, -1)
        distance = jnp.minimum(distance, dist)
        farthest = jnp.argmax(distance, -1).astype(jnp.int32)
        return centroids, distance, farthest

    centroids, _, _ = lax.fori_loop(
        0, npoint, body, (centroids0, distance0, farthest0))
    return centroids


def ball_query(radius, nsample, xyz, new_xyz):
    B, N, _ = xyz.shape
    _, Np, _ = new_xyz.shape
    sqrdists = square_distance(new_xyz, xyz)                    # [B, Np, N]
    group_idx = jnp.broadcast_to(jnp.arange(N, dtype=jnp.int32), (B, Np, N))
    group_idx = jnp.where(sqrdists > radius ** 2, N, group_idx)
    group_idx = jnp.sort(group_idx, axis=-1)[:, :, :nsample]
    group_first = group_idx[:, :, 0:1]
    group_idx = jnp.where(group_idx == N, group_first, group_idx)
    return group_idx


def sample_and_group(npoint, radius, nsample, xyz, points, fps_key):
    fps_idx = farthest_point_sample(xyz, npoint, fps_key)
    new_xyz = index_points(xyz, fps_idx)                        # [B, Np, 3]
    idx = ball_query(radius, nsample, xyz, new_xyz)             # [B, Np, Ns]
    # Pad the sample count to a multiple of 8 by duplicating the first in-ball
    # index: duplicates cannot change the max, and the cheap index pad avoids
    # an extra HBM pass over the gathered slab.
    ns_pad = _round_up(max(nsample, 8), 8)
    if ns_pad != nsample:
        dup = jnp.broadcast_to(idx[:, :, :1], idx.shape[:-1] + (ns_pad - nsample,))
        idx = jnp.concatenate([idx, dup], axis=-1)
    grouped_xyz = index_points(xyz, idx)                        # [B, Np, Ns, 3]
    grouped_xyz = grouped_xyz - new_xyz[:, :, None, :]
    if points is not None:
        grouped_points = index_points(points, idx)              # [B, Np, Ns, D]
        new_points = jnp.concatenate([grouped_xyz, grouped_points], axis=-1)
    else:
        new_points = grouped_xyz
    return new_xyz, new_points


def sample_and_group_all(xyz, points):
    B, N, C = xyz.shape
    new_xyz = jnp.zeros((B, 1, C), dtype=xyz.dtype)
    grouped_xyz = xyz.reshape(B, 1, N, C)
    if points is not None:
        new_points = jnp.concatenate(
            [grouped_xyz, points.reshape(B, 1, N, -1)], axis=-1)
    else:
        new_points = grouped_xyz
    return new_xyz, new_points


# ----------------------------------------------------------------------------
# Parameter init (deterministic, synthetic) + conv/BN folding
# ----------------------------------------------------------------------------
def init_sa_params(key, in_channel, mlp):
    in_ch = in_channel + 3  # module does in_channel += 3
    params = []
    for out_ch in mlp:
        key, kw, kb, kg, kbeta = jax.random.split(key, 5)
        W = 0.1 * jax.random.normal(kw, (out_ch, in_ch), dtype=jnp.float32)
        b = 0.1 * jax.random.normal(kb, (out_ch,), dtype=jnp.float32)
        gamma = 1.0 + 0.1 * jax.random.normal(kg, (out_ch,), dtype=jnp.float32)
        beta = 0.1 * jax.random.normal(kbeta, (out_ch,), dtype=jnp.float32)
        running_mean = jnp.zeros((out_ch,), jnp.float32)
        running_var = jnp.ones((out_ch,), jnp.float32)
        params.append((W, b, gamma, beta, running_mean, running_var))
        in_ch = out_ch
    return params


def fold_conv_bn(params):
    folded = []
    for (W, b, gamma, beta, rm, rv) in params:
        scale = gamma / jnp.sqrt(rv + BN_EPS)                   # [C_out]
        w_eff = (W * scale[:, None]).T.astype(jnp.float32)      # [C_in, C_out]
        shift_eff = ((b - rm) * scale + beta).reshape(1, -1).astype(jnp.float32)
        folded.append((w_eff, shift_eff))
    return folded


# ----------------------------------------------------------------------------
# Full forward (equivalent to Pointnet_SA_module.forward)
# ----------------------------------------------------------------------------
def pointnet_sa_forward(xyz, points, folded_params, *, npoint, radius, nsample,
                        group_all, fps_key):
    if group_all:
        new_xyz, new_points = sample_and_group_all(xyz, points)
    else:
        new_xyz, new_points = sample_and_group(
            npoint, radius, nsample, xyz, points, fps_key)
    # PyTorch: permute -> 1x1 conv_bn stack -> max over Ns -> permute back.
    # All of that is the Pallas kernel (channels-last layout).
    new_feats = mlp_max_pallas(new_points, folded_params)       # [B, Np, C_out]
    return new_xyz, new_feats


if __name__ == "__main__":
    key = jax.random.PRNGKey(0)
    k_xyz, k_pts, k_fps, k_par, k_chk = jax.random.split(key, 5)

    # Small shapes consistent with the module.
    B, N, D = 2, 16, 4          # batch, points, feature channels
    npoint, radius, nsample = 8, 0.5, 8
    mlp = [8, 16]
    group_all = False

    xyz = jax.random.uniform(k_xyz, (B, N, 3), dtype=jnp.float32)
    points = jax.random.normal(k_pts, (B, N, D), dtype=jnp.float32)

    raw_params = init_sa_params(k_par, D, mlp)
    folded_params = fold_conv_bn(raw_params)

    forward = jax.jit(pointnet_sa_forward,
                      static_argnames=("npoint", "nsample", "group_all"))
    new_xyz, new_feats = forward(
        xyz, points, folded_params,
        npoint=npoint, radius=radius, nsample=nsample,
        group_all=group_all, fps_key=k_fps)

    jax.block_until_ready((new_xyz, new_feats))
    assert new_xyz.shape == (B, npoint, 3)
    assert new_feats.shape == (B, npoint, mlp[-1])
    assert bool(jnp.all(jnp.isfinite(new_feats)))

    # Isolated numerical check of the Pallas MLP+max kernel against a pure-JAX
    # f32 reference (loose tolerance: kernel uses bf16 MXU operands).
    test_grp = jax.random.normal(k_chk, (B, npoint, nsample, D + 3),
                                 dtype=jnp.float32)
    got = jax.block_until_ready(mlp_max_pallas(test_grp, folded_params))
    h = test_grp
    for w, s in folded_params:
        h = jnp.einsum("bnsc,cd->bnsd", h, w) + s
        h = jnp.maximum(h, LEAKY_SLOPE * h)
    want = jnp.max(h, axis=2)
    max_err = float(jnp.max(jnp.abs(got - want)))
    assert max_err < 5e-2, f"kernel mismatch vs f32 reference: {max_err}"

    print("KERNEL_OK")
</pallas_src>

<mosaic_0001>
module attributes {stable_mosaic.version = 11 : i64} {
  func.func @kernel(%arg0: i32, %arg1: memref<128x7xf32, #tpu.memory_space<vmem>>, %arg2: memref<7x8xbf16, #tpu.memory_space<vmem>>, %arg3: memref<1x8xbf16, #tpu.memory_space<vmem>>, %arg4: memref<8x128xbf16, #tpu.memory_space<vmem>>, %arg5: memref<1x128xf32, #tpu.memory_space<vmem>>, %arg6: memref<16x128xf32, #tpu.memory_space<vmem>>) attributes {dimension_semantics = [#tpu.dimension_semantics<parallel>], iteration_bounds = array<i64: 1>, scalar_prefetch = 0 : i64, scratch_operands = 0 : i64, tpu.core_type = #tpu.core_type<tc>, window_params = [{transform_indices = @transform_0, window_bounds = array<i64: 128, 7>}, {pipeline_mode = #tpu.pipeline_mode<synchronous>, transform_indices = @transform_1, window_bounds = array<i64: 7, 8>}, {pipeline_mode = #tpu.pipeline_mode<synchronous>, transform_indices = @transform_2, window_bounds = array<i64: 1, 8>}, {pipeline_mode = #tpu.pipeline_mode<synchronous>, transform_indices = @transform_3, window_bounds = array<i64: 8, 128>}, {pipeline_mode = #tpu.pipeline_mode<synchronous>, transform_indices = @transform_4, window_bounds = array<i64: 1, 128>}, {transform_indices = @transform_5, window_bounds = array<i64: 16, 128>}]} {
    %c0 = arith.constant 0 : index
    %c0_0 = arith.constant 0 : index
    %0 = vector.load %arg1[%c0, %c0_0] : memref<128x7xf32, #tpu.memory_space<vmem>>, vector<128x7xf32>
    %1 = arith.truncf %0 : vector<128x7xf32> to vector<128x7xbf16>
    %c0_1 = arith.constant 0 : index
    %c0_2 = arith.constant 0 : index
    %2 = vector.load %arg2[%c0_1, %c0_2] : memref<7x8xbf16, #tpu.memory_space<vmem>>, vector<7x8xbf16>
    %c0_3 = arith.constant 0 : index
    %c0_4 = arith.constant 0 : index
    %3 = vector.load %arg3[%c0_3, %c0_4] : memref<1x8xbf16, #tpu.memory_space<vmem>>, vector<1x8xbf16>
    %cst = arith.constant dense<0.000000e+00> : vector<128x8xf32>
    %4 = tpu.matmul %1, %2, %cst {dimension_numbers = #tpu.dot_dimension_numbers<[1], [0], [0], [1], [0, 0, 1, 1], [], []>} : vector<128x7xbf16>, vector<7x8xbf16>, vector<128x8xf32> -> vector<128x8xf32>
    %5 = arith.truncf %4 : vector<128x8xf32> to vector<128x8xbf16>
    %6 = vector.broadcast %3 : vector<1x8xbf16> to vector<128x8xbf16>
    %7 = arith.addf %5, %6 : vector<128x8xbf16>
    %cst_5 = arith.constant 1.000980e-02 : bf16
    %8 = vector.broadcast %cst_5 : bf16 to vector<128x8xbf16>
    %9 = arith.mulf %8, %7 : vector<128x8xbf16>
    %10 = arith.maximumf %7, %9 : vector<128x8xbf16>
    %c0_6 = arith.constant 0 : index
    %c0_7 = arith.constant 0 : index
    %11 = vector.load %arg4[%c0_6, %c0_7] : memref<8x128xbf16, #tpu.memory_space<vmem>>, vector<8x128xbf16>
    %c0_8 = arith.constant 0 : index
    %c0_9 = arith.constant 0 : index
    %12 = vector.load %arg5[%c0_8, %c0_9] : memref<1x128xf32, #tpu.memory_space<vmem>>, vector<1x128xf32>
    %cst_10 = arith.constant dense<0.000000e+00> : vector<128x128xf32>
    %13 = tpu.matmul %10, %11, %cst_10 {dimension_numbers = #tpu.dot_dimension_numbers<[1], [0], [0], [1], [0, 0, 1, 1], [], []>} : vector<128x8xbf16>, vector<8x128xbf16>, vector<128x128xf32> -> vector<128x128xf32>
    %14 = vector.broadcast %12 : vector<1x128xf32> to vector<128x128xf32>
    %15 = arith.addf %13, %14 : vector<128x128xf32>
    %cst_11 = arith.constant 0.00999999977 : f32
    %16 = vector.broadcast %cst_11 : f32 to vector<128x128xf32>
    %17 = arith.mulf %16, %15 : vector<128x128xf32>
    %18 = arith.maximumf %15, %17 : vector<128x128xf32>
    %19 = vector.shape_cast %18 : vector<128x128xf32> to vector<16x8x128xf32>
    %cst_12 = arith.constant dense<0xFF800000> : vector<16x128xf32>
    %20 = vector.multi_reduction <maximumf>, %19, %cst_12 [1] : vector<16x8x128xf32> to vector<16x128xf32>
    %c0_13 = arith.constant 0 : index
    %c0_14 = arith.constant 0 : index
    %21 = vector.load %arg6[%c0_13, %c0_14] : memref<16x128xf32, #tpu.memory_space<vmem>>, vector<16x128xf32>
    tpu.vector_store %arg6[%c0_13, %c0_14], %20 {strides = array<i32>} : memref<16x128xf32, #tpu.memory_space<vmem>>, vector<16x128xf32>,
    return
  }
  func.func @transform_0(%arg0: i32) -> (i32, i32) {
    %c0_i32 = arith.constant 0 : i32
    %c0_i32_0 = arith.constant 0 : i32
    return %arg0, %c0_i32 : i32, i32
  }
  func.func @transform_1(%arg0: i32) -> (i32, i32) {
    %c0_i32 = arith.constant 0 : i32
    %c0_i32_0 = arith.constant 0 : i32
    %c0_i32_1 = arith.constant 0 : i32
    return %c0_i32, %c0_i32_0 : i32, i32
  }
  func.func @transform_2(%arg0: i32) -> (i32, i32) {
    %c0_i32 = arith.constant 0 : i32
    %c0_i32_0 = arith.constant 0 : i32
    %c0_i32_1 = arith.constant 0 : i32
    return %c0_i32, %c0_i32_0 : i32, i32
  }
  func.func @transform_3(%arg0: i32) -> (i32, i32) {
    %c0_i32 = arith.constant 0 : i32
    %c0_i32_0 = arith.constant 0 : i32
    %c0_i32_1 = arith.constant 0 : i32
    return %c0_i32, %c0_i32_0 : i32, i32
  }
  func.func @transform_4(%arg0: i32) -> (i32, i32) {
    %c0_i32 = arith.constant 0 : i32
    %c0_i32_0 = arith.constant 0 : i32
    %c0_i32_1 = arith.constant 0 : i32
    return %c0_i32, %c0_i32_0 : i32, i32
  }
  func.func @transform_5(%arg0: i32) -> (i32, i32) {
    %c0_i32 = arith.constant 0 : i32
    %c0_i32_0 = arith.constant 0 : i32
    return %arg0, %c0_i32 : i32, i32
  }
}

</mosaic_0001>

<llo_original>
// kernel: custom-call.8
$region0: #{custom-call.8}
  %s0 = inlined_call_operand.vmem [shape: f32[2,16], index: 0, kind: output, shape index: {}]

// kernel: pointnet_sa_forward.1
$region0: #{pointnet_sa_forward.1}
  #allocation0 [shape = 'u32[]', space=smem, size = 0x4, offset = 0x4, fixed_abs, tag = 'smem constant byte address 0x4 - core index']
  #allocation1 [shape = 'u32[144,128]{1,0:T(1,128)}', space=vmem, size = 0x12000, scoped, tag = 'internal scratch']
  %s0 = inlined_call_operand.vmem [shape: f32[128,7], index: 0, kind: input, shape index: {}]
  %s1 = inlined_call_operand.vmem [shape: bf16[7,8], index: 1, kind: input, shape index: {}]
  %s2 = inlined_call_operand.vmem [shape: bf16[1,8], index: 2, kind: input, shape index: {}]
  %s3 = inlined_call_operand.vmem [shape: bf16[8,128], index: 3, kind: input, shape index: {}]
  %s4 = inlined_call_operand.vmem [shape: f32[1,128], index: 4, kind: input, shape index: {}]
  %s5 = inlined_call_operand.vmem [shape: f32[16,128], index: 5, kind: output, shape index: {}]
  %s6 = sld [smem:[#allocation0]]
  $region30: #{pointnet_sa_forward.1} parent=0
    _
  %s8 = ssub.s32 1, %s6
  %s9 = scalar_select 0, %s8, %s6
  // Predicated region
  $region2: #{pointnet_sa_forward.1} parent=0 // pred_check
    _
  $region3: #{pointnet_sa_forward.1} parent=0 // pred_check_branch
    %11 = sbr.rel (0) target = $region5
  $region4: #{pointnet_sa_forward.1} parent=0 // pred_region
    _
  $region5: #{pointnet_sa_forward.1} parent=0 // pred_fallthru
    _
  // Predicated region
  $region6: #{pointnet_sa_forward.1} parent=0 // pred_check
    _
  $region7: #{pointnet_sa_forward.1} parent=0 // pred_check_branch
    %13 = sbr.rel (0) target = $region9
  $region8: #{pointnet_sa_forward.1} parent=0 // pred_region
    _
  $region9: #{pointnet_sa_forward.1} parent=0 // pred_fallthru
    _
  // Predicated region
  $region10: #{pointnet_sa_forward.1} parent=0 // pred_check
    _
  $region11: #{pointnet_sa_forward.1} parent=0 // pred_check_branch
    %15 = sbr.rel (0) target = $region13
  $region12: #{pointnet_sa_forward.1} parent=0 // pred_region
    _
  $region13: #{pointnet_sa_forward.1} parent=0 // pred_fallthru
    _
  // Predicated region
  $region14: #{pointnet_sa_forward.1} parent=0 // pred_check
    _
  $region15: #{pointnet_sa_forward.1} parent=0 // pred_check_branch
    %17 = sbr.rel (0) target = $region17
  $region16: #{pointnet_sa_forward.1} parent=0 // pred_region
    _
  $region17: #{pointnet_sa_forward.1} parent=0 // pred_fallthru
    _
  // Predicated region
  $region18: #{pointnet_sa_forward.1} parent=0 // pred_check
    _
  $region19: #{pointnet_sa_forward.1} parent=0 // pred_check_branch
    %19 = sbr.rel (0) target = $region21
  $region20: #{pointnet_sa_forward.1} parent=0 // pred_region
    _
  $region21: #{pointnet_sa_forward.1} parent=0 // pred_fallthru
    _
  %v22 = vld [vmem:[%s0] sm:$0xff]
  %v23 = vld [vmem:[%s0 + $0x8] sm:$0xff]
  %v24 = vld [vmem:[%s0 + $0x10] sm:$0xff]
  %v25 = vld [vmem:[%s0 + $0x18] sm:$0xff]
  %v26 = vld [vmem:[%s0 + $0x20] sm:$0xff]
  %v27 = vld [vmem:[%s0 + $0x28] sm:$0xff]
  %v28 = vld [vmem:[%s0 + $0x30] sm:$0xff]
  %v29 = vld [vmem:[%s0 + $0x38] sm:$0xff]
  %v30 = vld [vmem:[%s0 + $0x40] sm:$0xff]
  %v31 = vld [vmem:[%s0 + $0x48] sm:$0xff]
  %v32 = vld [vmem:[%s0 + $0x50] sm:$0xff]
  %v33 = vld [vmem:[%s0 + $0x58] sm:$0xff]
  %v34 = vld [vmem:[%s0 + $0x60] sm:$0xff]
  %v35 = vld [vmem:[%s0 + $0x68] sm:$0xff]
  %v36 = vld [vmem:[%s0 + $0x70] sm:$0xff]
  %v37 = vld [vmem:[%s0 + $0x78] sm:$0xff]
  %v38 = vpack.c.bf16 %v23, %v22
  %v39 = vpack.c.bf16 %v25, %v24
  %v40 = vpack.c.bf16 %v27, %v26
  %v41 = vpack.c.bf16 %v29, %v28
  %v42 = vpack.c.bf16 %v31, %v30
  %v43 = vpack.c.bf16 %v33, %v32
  %v44 = vpack.c.bf16 %v35, %v34
  %v45 = vpack.c.bf16 %v37, %v36
  %v46 = vld [vmem:[%s1] sm:$0xf]
  %v47 = vld [vmem:[%s2] sm:$0x1]
  %vm48 = vcmask 56320
  %v50 = vsel %vm48, %v38, 0
  %v53 = vsel %vm48, %v39, 0
  %v56 = vsel %vm48, %v40, 0
  %v59 = vsel %vm48, %v41, 0
  %v62 = vsel %vm48, %v42, 0
  %v65 = vsel %vm48, %v43, 0
  %v68 = vsel %vm48, %v44, 0
  %v71 = vsel %vm48, %v45, 0
  %vm73 = vcmask 1042432
  %vm74 = vcmask 1043456
  %v75 = vsel %vm73, 4294967295, 65535
  %v76 = vsel %vm74, %v75, 0
  %v78 = vand.u32 %v46, %v76
  %80 = vmatprep.subr.bf16.mxu0 0
  %81 = vmatpush1.bf16.msra.mxu0 %v78
  %82 = vmatprep.subr.bf16.mxu0 0
  %83 = vmatpush1.bf16.msra.mxu0 0
  %84 = vmatprep.subr.bf16.mxu0 0
  %85 = vmatpush1.bf16.msra.mxu0 0
  %86 = vmatprep.subr.bf16.mxu0 0
  %87 = vmatpush1.bf16.msra.mxu0 0
  %88 = vmatprep.subr.bf16.mxu0 0
  %89 = vmatpush1.bf16.msra.mxu0 0
  %90 = vmatprep.subr.bf16.mxu0 0
  %91 = vmatpush1.bf16.msra.mxu0 0
  %92 = vmatprep.subr.bf16.mxu0 0
  %93 = vmatpush1.bf16.msra.mxu0 0
  %94 = vmatprep.subr.bf16.mxu0 0
  %95 = vmatpush1.bf16.msra.mxu0 0
  %96 = vmatprep.subr.bf16.mxu0 0
  %97 = vmatpush1.bf16.msra.mxu0 0
  %98 = vmatprep.subr.bf16.mxu0 0
  %99 = vmatpush1.bf16.msra.mxu0 0
  %100 = vmatprep.subr.bf16.mxu0 0
  %101 = vmatpush1.bf16.msra.mxu0 0
  %102 = vmatprep.subr.bf16.mxu0 0
  %103 = vmatpush1.bf16.msra.mxu0 0
  %104 = vmatprep.subr.bf16.mxu0 0
  %105 = vmatpush1.bf16.msra.mxu0 0
  %106 = vmatprep.subr.bf16.mxu0 0
  %107 = vmatpush1.bf16.msra.mxu0 0
  %108 = vmatprep.subr.bf16.mxu0 0
  %109 = vmatpush1.bf16.msra.mxu0 0
  %110 = vmatprep.subr.bf16.mxu0 0
  %111 = vmatpush1.bf16.msra.mxu0 0
  %112 = vmatprep.mubr.bf16.mxu0 0
  %113 = vmatmul.mubr.bf16.gmra.mrb[0].mxu0 %v50
  %v114 = vpop.f32.mrb[0].mxu0
  %v115 = vadd.f32 0.0, %v114
  %v116 = vpop.f32.mrb[0].mxu0
  %v117 = vpop.f32.mrb[0].mxu0
  %v118 = vadd.f32 0.0, %v117
  %v119 = vpop.f32.mrb[0].mxu0
  %120 = vmatprep.mubr.bf16.mxu0 0
  %121 = vmatmul.mubr.bf16.gmra.mrb[0].mxu0 %v53
  %v122 = vpop.f32.mrb[0].mxu0
  %v123 = vadd.f32 0.0, %v122
  %v124 = vpop.f32.mrb[0].mxu0
  %v125 = vpop.f32.mrb[0].mxu0
  %v126 = vadd.f32 0.0, %v125
  %v127 = vpop.f32.mrb[0].mxu0
  %128 = vmatprep.mubr.bf16.mxu0 0
  %129 = vmatmul.mubr.bf16.gmra.mrb[0].mxu0 %v56
  %v130 = vpop.f32.mrb[0].mxu0
  %v131 = vadd.f32 0.0, %v130
  %v132 = vpop.f32.mrb[0].mxu0
  %v133 = vpop.f32.mrb[0].mxu0
  %v134 = vadd.f32 0.0, %v133
  %v135 = vpop.f32.mrb[0].mxu0
  %136 = vmatprep.mubr.bf16.mxu0 0
  %137 = vmatmul.mubr.bf16.gmra.mrb[0].mxu0 %v59
  %v138 = vpop.f32.mrb[0].mxu0
  %v139 = vadd.f32 0.0, %v138
  %v140 = vpop.f32.mrb[0].mxu0
  %v141 = vpop.f32.mrb[0].mxu0
  %v142 = vadd.f32 0.0, %v141
  %v143 = vpop.f32.mrb[0].mxu0
  %144 = vmatprep.mubr.bf16.mxu0 0
  %145 = vmatmul.mubr.bf16.gmra.mrb[0].mxu0 %v62
  %v146 = vpop.f32.mrb[0].mxu0
  %v147 = vadd.f32 0.0, %v146
  %v148 = vpop.f32.mrb[0].mxu0
  %v149 = vpop.f32.mrb[0].mxu0
  %v150 = vadd.f32 0.0, %v149
  %v151 = vpop.f32.mrb[0].mxu0
  %152 = vmatprep.mubr.bf16.mxu0 0
  %153 = vmatmul.mubr.bf16.gmra.mrb[0].mxu0 %v65
  %v154 = vpop.f32.mrb[0].mxu0
  %v155 = vadd.f32 0.0, %v154
  %v156 = vpop.f32.mrb[0].mxu0
  %v157 = vpop.f32.mrb[0].mxu0
  %v158 = vadd.f32 0.0, %v157
  %v159 = vpop.f32.mrb[0].mxu0
  %160 = vmatprep.mubr.bf16.mxu0 0
  %161 = vmatmul.mubr.bf16.gmra.mrb[0].mxu0 %v68
  %v162 = vpop.f32.mrb[0].mxu0
  %v163 = vadd.f32 0.0, %v162
  %v164 = vpop.f32.mrb[0].mxu0
  %v165 = vpop.f32.mrb[0].mxu0
  %v166 = vadd.f32 0.0, %v165
  %v167 = vpop.f32.mrb[0].mxu0
  %168 = vmatprep.mubr.bf16.mxu0 0
  %169 = vmatmul.mubr.bf16.gmra.mrb[0].mxu0 %v71
  %v170 = vpop.f32.mrb[0].mxu0
  %v171 = vadd.f32 0.0, %v170
  %v172 = vpop.f32.mrb[0].mxu0
  %v173 = vpop.f32.mrb[0].mxu0
  %v174 = vadd.f32 0.0, %v173
  %v175 = vpop.f32.mrb[0].mxu0
  %176 = vdwg.mxu0
  %v177 = vpack.c.bf16 %v118, %v115
  %v178 = vpack.c.bf16 %v126, %v123
  %v179 = vpack.c.bf16 %v134, %v131
  %v180 = vpack.c.bf16 %v142, %v139
  %v181 = vpack.c.bf16 %v150, %v147
  %v182 = vpack.c.bf16 %v158, %v155
  %v183 = vpack.c.bf16 %v166, %v163
  %v184 = vpack.c.bf16 %v174, %v171
  %v186 = vpack.i.b16 %v47, %v47
  %v188 = vlaneseq
  %v189 = vshrl.u32 %v188, 7
  %v190 = vsub.s32 0, %v189
  %v191 = vrot.slane %v186, %v190
  %v192 = vadd.bf16 %v177, %v191
  %v193 = vadd.bf16 %v178, %v191
  %v194 = vadd.bf16 %v179, %v191
  %v195 = vadd.bf16 %v180, %v191
  %v196 = vadd.bf16 %v181, %v191
  %v197 = vadd.bf16 %v182, %v191
  %v198 = vadd.bf16 %v183, %v191
  %v199 = vadd.bf16 %v184, %v191
  %v200 = vmul.bf16 %v192, 1009007652
  %v201 = vmul.bf16 %v193, 1009007652
  %v202 = vmul.bf16 %v194, 1009007652
  %v203 = vmul.bf16 %v195, 1009007652
  %v204 = vmul.bf16 %v196, 1009007652
  %v205 = vmul.bf16 %v197, 1009007652
  %v206 = vmul.bf16 %v198, 1009007652
  %v207 = vmul.bf16 %v199, 1009007652
  %v208 = vmax.bf16 %v192, %v200
  %v209 = vmax.bf16 %v193, %v201
  %v210 = vmax.bf16 %v194, %v202
  %v211 = vmax.bf16 %v195, %v203
  %v212 = vmax.bf16 %v196, %v204
  %v213 = vmax.bf16 %v197, %v205
  %v214 = vmax.bf16 %v198, %v206
  %v215 = vmax.bf16 %v199, %v207
  %v216 = vld [vmem:[%s3] sm:$0xf]
  %v217 = vld [vmem:[%s4] sm:$0x1]
  %v219 = vlaneseq
  %v220 = vshrl.u32 %v219, 7
  %v221 = vsub.s32 0, %v220
  %v222 = vrot.slane %v217, %v221
  %vm224 = vcmask 64512
  %v226 = vsel %vm224, %v208, 0
  %v229 = vsel %vm224, %v209, 0
  %v232 = vsel %vm224, %v210, 0
  %v235 = vsel %vm224, %v211, 0
  %v238 = vsel %vm224, %v212, 0
  %v241 = vsel %vm224, %v213, 0
  %v244 = vsel %vm224, %v214, 0
  %v247 = vsel %vm224, %v215, 0
  %v250 = vsel %vm74, %v216, 0
  %252 = vmatprep.subr.bf16.mxu0 0
  %253 = vmatpush1.bf16.msra.mxu0 %v250
  %254 = vmatprep.subr.bf16.mxu0 0
  %255 = vmatpush1.bf16.msra.mxu0 0
  %256 = vmatprep.subr.bf16.mxu0 0
  %257 = vmatpush1.bf16.msra.mxu0 0
  %258 = vmatprep.subr.bf16.mxu0 0
  %259 = vmatpush1.bf16.msra.mxu0 0
  %260 = vmatprep.subr.bf16.mxu0 0
  %261 = vmatpush1.bf16.msra.mxu0 0
  %262 = vmatprep.subr.bf16.mxu0 0
  %263 = vmatpush1.bf16.msra.mxu0 0
  %264 = vmatprep.subr.bf16.mxu0 0
  %265 = vmatpush1.bf16.msra.mxu0 0
  %266 = vmatprep.subr.bf16.mxu0 0
  %267 = vmatpush1.bf16.msra.mxu0 0
  %268 = vmatprep.subr.bf16.mxu0 0
  %269 = vmatpush1.bf16.msra.mxu0 0
  %270 = vmatprep.subr.bf16.mxu0 0
  %271 = vmatpush1.bf16.msra.mxu0 0
  %272 = vmatprep.subr.bf16.mxu0 0
  %273 = vmatpush1.bf16.msra.mxu0 0
  %274 = vmatprep.subr.bf16.mxu0 0
  %275 = vmatpush1.bf16.msra.mxu0 0
  %276 = vmatprep.subr.bf16.mxu0 0
  %277 = vmatpush1.bf16.msra.mxu0 0
  %278 = vmatprep.subr.bf16.mxu0 0
  %279 = vmatpush1.bf16.msra.mxu0 0
  %280 = vmatprep.subr.bf16.mxu0 0
  %281 = vmatpush1.bf16.msra.mxu0 0
  %282 = vmatprep.subr.bf16.mxu0 0
  %283 = vmatpush1.bf16.msra.mxu0 0
  %284 = vmatprep.mubr.bf16.mxu0 0
  %285 = vmatmul.mubr.bf16.gmra.mrb[0].mxu0 %v226
  %v286 = vpop.f32.mrb[0].mxu0
  %v287 = vadd.f32 %v222, %v286
  %v288 = vpop.f32.mrb[0].mxu0
  %v289 = vpop.f32.mrb[0].mxu0
  %v290 = vadd.f32 %v222, %v289
  %v291 = vpop.f32.mrb[0].mxu0
  %292 = vmatprep.mubr.bf16.mxu0 0
  %293 = vmatmul.mubr.bf16.gmra.mrb[0].mxu0 %v229
  %v294 = vpop.f32.mrb[0].mxu0
  %v295 = vadd.f32 %v222, %v294
  %v296 = vpop.f32.mrb[0].mxu0
  %v297 = vpop.f32.mrb[0].mxu0
  %v298 = vadd.f32 %v222, %v297
  %v299 = vpop.f32.mrb[0].mxu0
  %300 = vmatprep.mubr.bf16.mxu0 0
  %301 = vmatmul.mubr.bf16.gmra.mrb[0].mxu0 %v232
  %v302 = vpop.f32.mrb[0].mxu0
  %v303 = vadd.f32 %v222, %v302
  %v304 = vpop.f32.mrb[0].mxu0
  %v305 = vpop.f32.mrb[0].mxu0
  %v306 = vadd.f32 %v222, %v305
  %v307 = vpop.f32.mrb[0].mxu0
  %308 = vmatprep.mubr.bf16.mxu0 0
  %309 = vmatmul.mubr.bf16.gmra.mrb[0].mxu0 %v235
  %v310 = vpop.f32.mrb[0].mxu0
  %v311 = vadd.f32 %v222, %v310
  %v312 = vpop.f32.mrb[0].mxu0
  %v313 = vpop.f32.mrb[0].mxu0
  %v314 = vadd.f32 %v222, %v313
  %v315 = vpop.f32.mrb[0].mxu0
  %316 = vmatprep.mubr.bf16.mxu0 0
  %317 = vmatmul.mubr.bf16.gmra.mrb[0].mxu0 %v238
  %v318 = vpop.f32.mrb[0].mxu0
  %v319 = vadd.f32 %v222, %v318
  %v320 = vpop.f32.mrb[0].mxu0
  %v321 = vpop.f32.mrb[0].mxu0
  %v322 = vadd.f32 %v222, %v321
  %v323 = vpop.f32.mrb[0].mxu0
  %324 = vmatprep.mubr.bf16.mxu0 0
  %325 = vmatmul.mubr.bf16.gmra.mrb[0].mxu0 %v241
  %v326 = vpop.f32.mrb[0].mxu0
  %v327 = vadd.f32 %v222, %v326
  %v328 = vpop.f32.mrb[0].mxu0
  %v329 = vpop.f32.mrb[0].mxu0
  %v330 = vadd.f32 %v222, %v329
  %v331 = vpop.f32.mrb[0].mxu0
  %332 = vmatprep.mubr.bf16.mxu0 0
  %333 = vmatmul.mubr.bf16.gmra.mrb[0].mxu0 %v244
  %v334 = vpop.f32.mrb[0].mxu0
  %v335 = vadd.f32 %v222, %v334
  %v336 = vpop.f32.mrb[0].mxu0
  %v337 = vpop.f32.mrb[0].mxu0
  %v338 = vadd.f32 %v222, %v337
  %v339 = vpop.f32.mrb[0].mxu0
  %340 = vmatprep.mubr.bf16.mxu0 0
  %341 = vmatmul.mubr.bf16.gmra.mrb[0].mxu0 %v247
  %v342 = vpop.f32.mrb[0].mxu0
  %v343 = vadd.f32 %v222, %v342
  %v344 = vpop.f32.mrb[0].mxu0
  %v345 = vpop.f32.mrb[0].mxu0
  %v346 = vadd.f32 %v222, %v345
  %v347 = vpop.f32.mrb[0].mxu0
  %348 = vdwg.mxu0
  %v349 = vmul.f32 %v287, 0.01
  %v350 = vmul.f32 %v290, 0.01
  %v351 = vmul.f32 %v295, 0.01
  %v352 = vmul.f32 %v298, 0.01
  %v353 = vmul.f32 %v303, 0.01
  %v354 = vmul.f32 %v306, 0.01
  %v355 = vmul.f32 %v311, 0.01
  %v356 = vmul.f32 %v314, 0.01
  %v357 = vmul.f32 %v319, 0.01
  %v358 = vmul.f32 %v322, 0.01
  %v359 = vmul.f32 %v327, 0.01
  %v360 = vmul.f32 %v330, 0.01
  %v361 = vmul.f32 %v335, 0.01
  %v362 = vmul.f32 %v338, 0.01
  %v363 = vmul.f32 %v343, 0.01
  %v364 = vmul.f32 %v346, 0.01
  %v365 = vmax.f32 %v287, %v349
  %v366 = vmax.f32 %v290, %v350
  %v367 = vmax.f32 %v295, %v351
  %v368 = vmax.f32 %v298, %v352
  %v369 = vmax.f32 %v303, %v353
  %v370 = vmax.f32 %v306, %v354
  %v371 = vmax.f32 %v311, %v355
  %v372 = vmax.f32 %v314, %v356
  %v373 = vmax.f32 %v319, %v357
  %v374 = vmax.f32 %v322, %v358
  %v375 = vmax.f32 %v327, %v359
  %v376 = vmax.f32 %v330, %v360
  %v377 = vmax.f32 %v335, %v361
  %v378 = vmax.f32 %v338, %v362
  %v379 = vmax.f32 %v343, %v363
  %v380 = vmax.f32 %v346, %v364
  %v381 = vrot.slane %v365, 4
  %v382 = vmax.f32 %v365, %v381
  %v383 = vrot.slane %v382, 2
  %v384 = vmax.f32 %v382, %v383
  %v385 = vrot.slane %v384, 1
  %v386 = vmax.f32 %v384, %v385
  %v387 = vrot.slane %v366, 4
  %v388 = vmax.f32 %v366, %v387
  %v389 = vrot.slane %v388, 2
  %v390 = vmax.f32 %v388, %v389
  %v391 = vrot.slane %v390, 1
  %v392 = vmax.f32 %v390, %v391
  %v393 = vrot.slane %v367, 4
  %v394 = vmax.f32 %v367, %v393
  %v395 = vrot.slane %v394, 2
  %v396 = vmax.f32 %v394, %v395
  %v397 = vrot.slane %v396, 1
  %v398 = vmax.f32 %v396, %v397
  %v399 = vrot.slane %v368, 4
  %v400 = vmax.f32 %v368, %v399
  %v401 = vrot.slane %v400, 2
  %v402 = vmax.f32 %v400, %v401
  %v403 = vrot.slane %v402, 1
  %v404 = vmax.f32 %v402, %v403
  %v405 = vrot.slane %v369, 4
  %v406 = vmax.f32 %v369, %v405
  %v407 = vrot.slane %v406, 2
  %v408 = vmax.f32 %v406, %v407
  %v409 = vrot.slane %v408, 1
  %v410 = vmax.f32 %v408, %v409
  %v411 = vrot.slane %v370, 4
  %v412 = vmax.f32 %v370, %v411
  %v413 = vrot.slane %v412, 2
  %v414 = vmax.f32 %v412, %v413
  %v415 = vrot.slane %v414, 1
  %v416 = vmax.f32 %v414, %v415
  %v417 = vrot.slane %v371, 4
  %v418 = vmax.f32 %v371, %v417
  %v419 = vrot.slane %v418, 2
  %v420 = vmax.f32 %v418, %v419
  %v421 = vrot.slane %v420, 1
  %v422 = vmax.f32 %v420, %v421
  %v423 = vrot.slane %v372, 4
  %v424 = vmax.f32 %v372, %v423
  %v425 = vrot.slane %v424, 2
  %v426 = vmax.f32 %v424, %v425
  %v427 = vrot.slane %v426, 1
  %v428 = vmax.f32 %v426, %v427
  %v429 = vrot.slane %v373, 4
  %v430 = vmax.f32 %v373, %v429
  %v431 = vrot.slane %v430, 2
  %v432 = vmax.f32 %v430, %v431
  %v433 = vrot.slane %v432, 1
  %v434 = vmax.f32 %v432, %v433
  %v435 = vrot.slane %v374, 4
  %v436 = vmax.f32 %v374, %v435
  %v437 = vrot.slane %v436, 2
  %v438 = vmax.f32 %v436, %v437
  %v439 = vrot.slane %v438, 1
  %v440 = vmax.f32 %v438, %v439
  %v441 = vrot.slane %v375, 4
  %v442 = vmax.f32 %v375, %v441
  %v443 = vrot.slane %v442, 2
  %v444 = vmax.f32 %v442, %v443
  %v445 = vrot.slane %v444, 1
  %v446 = vmax.f32 %v444, %v445
  %v447 = vrot.slane %v376, 4
  %v448 = vmax.f32 %v376, %v447
  %v449 = vrot.slane %v448, 2
  %v450 = vmax.f32 %v448, %v449
  %v451 = vrot.slane %v450, 1
  %v452 = vmax.f32 %v450, %v451
  %v453 = vrot.slane %v377, 4
  %v454 = vmax.f32 %v377, %v453
  %v455 = vrot.slane %v454, 2
  %v456 = vmax.f32 %v454, %v455
  %v457 = vrot.slane %v456, 1
  %v458 = vmax.f32 %v456, %v457
  %v459 = vrot.slane %v378, 4
  %v460 = vmax.f32 %v378, %v459
  %v461 = vrot.slane %v460, 2
  %v462 = vmax.f32 %v460, %v461
  %v463 = vrot.slane %v462, 1
  %v464 = vmax.f32 %v462, %v463
  %v465 = vrot.slane %v379, 4
  %v466 = vmax.f32 %v379, %v465
  %v467 = vrot.slane %v466, 2
  %v468 = vmax.f32 %v466, %v467
  %v469 = vrot.slane %v468, 1
  %v470 = vmax.f32 %v468, %v469
  %v471 = vrot.slane %v380, 4
  %v472 = vmax.f32 %v380, %v471
  %v473 = vrot.slane %v472, 2
  %v474 = vmax.f32 %v472, %v473
  %v475 = vrot.slane %v474, 1
  %v476 = vmax.f32 %v474, %v475
  %vm493 = vcmask 1041409
  %v494 = vsel %vm493, %v392, %v386
  %vm495 = vcmask 1042434
  %v496 = vsel %vm495, %v398, %v494
  %vm497 = vcmask 1043459
  %v498 = vsel %vm497, %v404, %v496
  %vm499 = vcmask 1044484
  %v500 = vsel %vm499, %v410, %v498
  %vm501 = vcmask 1045509
  %v502 = vsel %vm501, %v416, %v500
  %vm503 = vcmask 1046534
  %v504 = vsel %vm503, %v422, %v502
  %vm505 = vcmask 1047559
  %v506 = vsel %vm505, %v428, %v504
  %v507 = vsel %vm493, %v440, %v434
  %v508 = vsel %vm495, %v446, %v507
  %v509 = vsel %vm497, %v452, %v508
  %v510 = vsel %vm499, %v458, %v509
  %v511 = vsel %vm501, %v464, %v510
  %v512 = vsel %vm503, %v470, %v511
  %v513 = vsel %vm505, %v476, %v512
  %516 = vst [vmem:[%s5] sm:$0xff] %v506
  %517 = vst [vmem:[%s5 + $0x8] sm:$0xff] %v513
  // Predicated region
  $region22: #{pointnet_sa_forward.1} parent=0 // pred_check
    _
  $region23: #{pointnet_sa_forward.1} parent=0 // pred_check_branch
    %519 = sbr.rel (0) target = $region25
  $region24: #{pointnet_sa_forward.1} parent=0 // pred_region
    _
  $region25: #{pointnet_sa_forward.1} parent=0 // pred_fallthru
    _
  // Predicated region
  $region26: #{pointnet_sa_forward.1} parent=0 // pred_check
    _
  $region27: #{pointnet_sa_forward.1} parent=0 // pred_check_branch
    %521 = sbr.rel (0) target = $region29
  $region28: #{pointnet_sa_forward.1} parent=0 // pred_region
    _
  $region29: #{pointnet_sa_forward.1} parent=0 // pred_fallthru
    _

</llo_original>
